<compile_context>
chip_gen: v7x
topology: tpu7x:2x2x1
jax: 0.10.0
libtpu: 0.0.40
codegen_flags: <defaults>
</compile_context>

<pallas_src>
import jax
import jax.numpy as jnp
from jax.experimental import pallas as pl
from jax.experimental.pallas import tpu as pltpu

H = W = 224
HW = H * W                   # 50176 = 196 * 256
C_IN = 3
N_OUT = 5
N_SUB = 196                  # sublane extent of the reshaped arrays
N_LANE_TOT = 256             # total lane extent (196 * 256 == HW)
TL = 128                     # lanes per grid step
N_STEPS = N_LANE_TOT // TL   # 2 steps -> one per TensorCore on v7x


def fused_conv_linear_kernel(x_ref, lw_ref, cp_ref, o_ref):
    """One HW half: 1x1 conv (VPU FMAs) + per-output product, sublane-reduced.

    x_ref : (3, 196, 128) f32 VMEM   -- activation tile
    lw_ref: (5, 196, 128) f32 VMEM   -- linear weight tile (native layout)
    cp_ref: (4,) f32 SMEM            -- [conv_w0, conv_w1, conv_w2, conv_b]
    o_ref : (1, 5, 128) f32 VMEM     -- per-output, lane-resolved partial sums
    """
    conv = (cp_ref[0] * x_ref[0]
            + cp_ref[1] * x_ref[1]
            + cp_ref[2] * x_ref[2]
            + cp_ref[3])                                    # (196, 128) dense VPU
    for n in range(N_OUT):                                  # 5 dense multiplies
        o_ref[0, n:n + 1, :] = jnp.sum(conv * lw_ref[n], axis=0, keepdims=True)


def m_forward(x_nchw, conv_w, conv_b, lin_w, lin_b):
    """x_nchw: (1, 3, 224, 224) f32. Returns (1, 5) f32."""
    # Free contiguous reshapes into lane/sublane-dense layouts.
    x3d = x_nchw.reshape(C_IN, N_SUB, N_LANE_TOT).astype(jnp.float32)
    lw3d = lin_w.reshape(N_OUT, N_SUB, N_LANE_TOT).astype(jnp.float32)
    conv_params = jnp.concatenate(
        [conv_w.reshape(C_IN), conv_b.reshape(1)]).astype(jnp.float32)

    partial = pl.pallas_call(
        fused_conv_linear_kernel,
        out_shape=jax.ShapeDtypeStruct((N_STEPS, N_OUT, TL), jnp.float32),
        grid_spec=pltpu.PrefetchScalarGridSpec(
            num_scalar_prefetch=0,
            grid=(N_STEPS,),
            in_specs=[
                pl.BlockSpec((C_IN, N_SUB, TL), lambda k: (0, 0, k)),    # x half
                pl.BlockSpec((N_OUT, N_SUB, TL), lambda k: (0, 0, k)),   # lin_w half
                pl.BlockSpec(memory_space=pltpu.MemorySpace.SMEM),       # conv w+b
            ],
            out_specs=pl.BlockSpec((1, N_OUT, TL), lambda k: (k, 0, 0)),
        ),
        compiler_params=pltpu.CompilerParams(
            dimension_semantics=("parallel",),   # independent halves -> 2 TCs on v7x
        ),
    )(x3d, lw3d, conv_params)

    # Tiny epilogue: reduce 2 steps x 128 lanes (1280 floats) + linear bias.
    out = partial.sum(axis=(0, 2)).reshape(1, N_OUT) + lin_b.reshape(1, N_OUT)
    return out


if __name__ == "__main__":
    key = jax.random.PRNGKey(0)
    kx, kcw, kcb, klw, klb = jax.random.split(key, 5)

    # Deterministic synthetic parameters (shapes match the PyTorch module).
    x = jax.random.normal(kx, (1, C_IN, H, W), jnp.float32)
    conv_w = jax.random.normal(kcw, (1, C_IN, 1, 1), jnp.float32) * 0.1
    conv_b = jax.random.normal(kcb, (1,), jnp.float32) * 0.1
    lin_w = jax.random.normal(klw, (N_OUT, HW), jnp.float32) * 0.01
    lin_b = jax.random.normal(klb, (N_OUT,), jnp.float32) * 0.1

    out = m_forward(x, conv_w, conv_b, lin_w, lin_b)
    out = jax.block_until_ready(out)

    # Pure-JAX reference (conv 1x1 -> flatten -> linear).
    conv_ref = jnp.einsum("oc,chw->ohw", conv_w.reshape(1, C_IN),
                          x[0]) + conv_b.reshape(1, 1, 1)             # (1, 224, 224)
    flat_ref = conv_ref.reshape(1, HW)
    ref = flat_ref @ lin_w.T + lin_b                                  # (1, 5)

    assert out.shape == (1, 5)
    assert jnp.allclose(out, ref, rtol=1e-3, atol=1e-3), (out, ref)

    print("KERNEL_OK")
</pallas_src>

<mosaic_0001>
module attributes {stable_mosaic.version = 11 : i64} {
  func.func @fused_conv_linear_kernel(%arg0: i32, %arg1: memref<3x196x128xf32, #tpu.memory_space<vmem>>, %arg2: memref<5x196x128xf32, #tpu.memory_space<vmem>>, %arg3: memref<4xf32, #tpu.memory_space<smem>>, %arg4: memref<1x5x128xf32, #tpu.memory_space<vmem>>) attributes {dimension_semantics = [#tpu.dimension_semantics<parallel>], iteration_bounds = array<i64: 2>, scalar_prefetch = 0 : i64, scratch_operands = 0 : i64, tpu.core_type = #tpu.core_type<tc>, window_params = [{transform_indices = @transform_0, window_bounds = array<i64: 3, 196, 128>}, {transform_indices = @transform_1, window_bounds = array<i64: 5, 196, 128>}, {transform_indices = @transform_2, window_bounds = array<i64: 4>}, {transform_indices = @transform_3, window_bounds = array<i64: 1, 5, 128>}]} {
    %c0 = arith.constant 0 : index
    %0 = memref.load %arg3[%c0] : memref<4xf32, #tpu.memory_space<smem>>
    %c0_0 = arith.constant 0 : index
    %c0_1 = arith.constant 0 : index
    %c0_2 = arith.constant 0 : index
    %1 = vector.load %arg1[%c0_0, %c0_1, %c0_2] : memref<3x196x128xf32, #tpu.memory_space<vmem>>, vector<1x196x128xf32>
    %2 = vector.shape_cast %1 : vector<1x196x128xf32> to vector<196x128xf32>
    %3 = vector.broadcast %0 : f32 to vector<196x128xf32>
    %4 = arith.mulf %3, %2 : vector<196x128xf32>
    %c1 = arith.constant 1 : index
    %5 = memref.load %arg3[%c1] : memref<4xf32, #tpu.memory_space<smem>>
    %c1_3 = arith.constant 1 : index
    %c0_4 = arith.constant 0 : index
    %c0_5 = arith.constant 0 : index
    %6 = vector.load %arg1[%c1_3, %c0_4, %c0_5] : memref<3x196x128xf32, #tpu.memory_space<vmem>>, vector<1x196x128xf32>
    %7 = vector.shape_cast %6 : vector<1x196x128xf32> to vector<196x128xf32>
    %8 = vector.broadcast %5 : f32 to vector<196x128xf32>
    %9 = arith.mulf %8, %7 : vector<196x128xf32>
    %10 = arith.addf %4, %9 : vector<196x128xf32>
    %c2 = arith.constant 2 : index
    %11 = memref.load %arg3[%c2] : memref<4xf32, #tpu.memory_space<smem>>
    %c2_6 = arith.constant 2 : index
    %c0_7 = arith.constant 0 : index
    %c0_8 = arith.constant 0 : index
    %12 = vector.load %arg1[%c2_6, %c0_7, %c0_8] : memref<3x196x128xf32, #tpu.memory_space<vmem>>, vector<1x196x128xf32>
    %13 = vector.shape_cast %12 : vector<1x196x128xf32> to vector<196x128xf32>
    %14 = vector.broadcast %11 : f32 to vector<196x128xf32>
    %15 = arith.mulf %14, %13 : vector<196x128xf32>
    %16 = arith.addf %10, %15 : vector<196x128xf32>
    %c3 = arith.constant 3 : index
    %17 = memref.load %arg3[%c3] : memref<4xf32, #tpu.memory_space<smem>>
    %18 = vector.broadcast %17 : f32 to vector<196x128xf32>
    %19 = arith.addf %16, %18 : vector<196x128xf32>
    %c0_9 = arith.constant 0 : index
    %c0_10 = arith.constant 0 : index
    %c0_11 = arith.constant 0 : index
    %20 = vector.load %arg2[%c0_9, %c0_10, %c0_11] : memref<5x196x128xf32, #tpu.memory_space<vmem>>, vector<1x196x128xf32>
    %21 = vector.shape_cast %20 : vector<1x196x128xf32> to vector<196x128xf32>
    %22 = arith.mulf %19, %21 : vector<196x128xf32>
    %cst = arith.constant dense<0.000000e+00> : vector<128xf32>
    %23 = vector.multi_reduction <add>, %22, %cst [0] : vector<196x128xf32> to vector<128xf32>
    %24 = vector.shape_cast %23 : vector<128xf32> to vector<1x128xf32>
    %c0_12 = arith.constant 0 : index
    %c0_13 = arith.constant 0 : index
    %c0_14 = arith.constant 0 : index
    %25 = vector.load %arg4[%c0_12, %c0_13, %c0_14] : memref<1x5x128xf32, #tpu.memory_space<vmem>>, vector<1x1x128xf32>
    %26 = vector.shape_cast %25 : vector<1x1x128xf32> to vector<1x128xf32>
    %27 = vector.shape_cast %24 : vector<1x128xf32> to vector<1x1x128xf32>
    tpu.vector_store %arg4[%c0_12, %c0_13, %c0_14], %27 {strides = array<i32>} : memref<1x5x128xf32, #tpu.memory_space<vmem>>, vector<1x1x128xf32>,
    %c1_15 = arith.constant 1 : index
    %c0_16 = arith.constant 0 : index
    %c0_17 = arith.constant 0 : index
    %28 = vector.load %arg2[%c1_15, %c0_16, %c0_17] : memref<5x196x128xf32, #tpu.memory_space<vmem>>, vector<1x196x128xf32>
    %29 = vector.shape_cast %28 : vector<1x196x128xf32> to vector<196x128xf32>
    %30 = arith.mulf %19, %29 : vector<196x128xf32>
    %cst_18 = arith.constant dense<0.000000e+00> : vector<128xf32>
    %31 = vector.multi_reduction <add>, %30, %cst_18 [0] : vector<196x128xf32> to vector<128xf32>
    %32 = vector.shape_cast %31 : vector<128xf32> to vector<1x128xf32>
    %c0_19 = arith.constant 0 : index
    %c1_20 = arith.constant 1 : index
    %c0_21 = arith.constant 0 : index
    %33 = vector.load %arg4[%c0_19, %c1_20, %c0_21] : memref<1x5x128xf32, #tpu.memory_space<vmem>>, vector<1x1x128xf32>
    %34 = vector.shape_cast %33 : vector<1x1x128xf32> to vector<1x128xf32>
    %35 = vector.shape_cast %32 : vector<1x128xf32> to vector<1x1x128xf32>
    tpu.vector_store %arg4[%c0_19, %c1_20, %c0_21], %35 {strides = array<i32>} : memref<1x5x128xf32, #tpu.memory_space<vmem>>, vector<1x1x128xf32>,
    %c2_22 = arith.constant 2 : index
    %c0_23 = arith.constant 0 : index
    %c0_24 = arith.constant 0 : index
    %36 = vector.load %arg2[%c2_22, %c0_23, %c0_24] : memref<5x196x128xf32, #tpu.memory_space<vmem>>, vector<1x196x128xf32>
    %37 = vector.shape_cast %36 : vector<1x196x128xf32> to vector<196x128xf32>
    %38 = arith.mulf %19, %37 : vector<196x128xf32>
    %cst_25 = arith.constant dense<0.000000e+00> : vector<128xf32>
    %39 = vector.multi_reduction <add>, %38, %cst_25 [0] : vector<196x128xf32> to vector<128xf32>
    %40 = vector.shape_cast %39 : vector<128xf32> to vector<1x128xf32>
    %c0_26 = arith.constant 0 : index
    %c2_27 = arith.constant 2 : index
    %c0_28 = arith.constant 0 : index
    %41 = vector.load %arg4[%c0_26, %c2_27, %c0_28] : memref<1x5x128xf32, #tpu.memory_space<vmem>>, vector<1x1x128xf32>
    %42 = vector.shape_cast %41 : vector<1x1x128xf32> to vector<1x128xf32>
    %43 = vector.shape_cast %40 : vector<1x128xf32> to vector<1x1x128xf32>
    tpu.vector_store %arg4[%c0_26, %c2_27, %c0_28], %43 {strides = array<i32>} : memref<1x5x128xf32, #tpu.memory_space<vmem>>, vector<1x1x128xf32>,
    %c3_29 = arith.constant 3 : index
    %c0_30 = arith.constant 0 : index
    %c0_31 = arith.constant 0 : index
    %44 = vector.load %arg2[%c3_29, %c0_30, %c0_31] : memref<5x196x128xf32, #tpu.memory_space<vmem>>, vector<1x196x128xf32>
    %45 = vector.shape_cast %44 : vector<1x196x128xf32> to vector<196x128xf32>
    %46 = arith.mulf %19, %45 : vector<196x128xf32>
    %cst_32 = arith.constant dense<0.000000e+00> : vector<128xf32>
    %47 = vector.multi_reduction <add>, %46, %cst_32 [0] : vector<196x128xf32> to vector<128xf32>
    %48 = vector.shape_cast %47 : vector<128xf32> to vector<1x128xf32>
    %c0_33 = arith.constant 0 : index
    %c3_34 = arith.constant 3 : index
    %c0_35 = arith.constant 0 : index
    %49 = vector.load %arg4[%c0_33, %c3_34, %c0_35] : memref<1x5x128xf32, #tpu.memory_space<vmem>>, vector<1x1x128xf32>
    %50 = vector.shape_cast %49 : vector<1x1x128xf32> to vector<1x128xf32>
    %51 = vector.shape_cast %48 : vector<1x128xf32> to vector<1x1x128xf32>
    tpu.vector_store %arg4[%c0_33, %c3_34, %c0_35], %51 {strides = array<i32>} : memref<1x5x128xf32, #tpu.memory_space<vmem>>, vector<1x1x128xf32>,
    %c4 = arith.constant 4 : index
    %c0_36 = arith.constant 0 : index
    %c0_37 = arith.constant 0 : index
    %52 = vector.load %arg2[%c4, %c0_36, %c0_37] : memref<5x196x128xf32, #tpu.memory_space<vmem>>, vector<1x196x128xf32>
    %53 = vector.shape_cast %52 : vector<1x196x128xf32> to vector<196x128xf32>
    %54 = arith.mulf %19, %53 : vector<196x128xf32>
    %cst_38 = arith.constant dense<0.000000e+00> : vector<128xf32>
    %55 = vector.multi_reduction <add>, %54, %cst_38 [0] : vector<196x128xf32> to vector<128xf32>
    %56 = vector.shape_cast %55 : vector<128xf32> to vector<1x128xf32>
    %c0_39 = arith.constant 0 : index
    %c4_40 = arith.constant 4 : index
    %c0_41 = arith.constant 0 : index
    %57 = vector.load %arg4[%c0_39, %c4_40, %c0_41] : memref<1x5x128xf32, #tpu.memory_space<vmem>>, vector<1x1x128xf32>
    %58 = vector.shape_cast %57 : vector<1x1x128xf32> to vector<1x128xf32>
    %59 = vector.shape_cast %56 : vector<1x128xf32> to vector<1x1x128xf32>
    tpu.vector_store %arg4[%c0_39, %c4_40, %c0_41], %59 {strides = array<i32>} : memref<1x5x128xf32, #tpu.memory_space<vmem>>, vector<1x1x128xf32>,
    return
  }
  func.func @transform_0(%arg0: i32) -> (i32, i32, i32) {
    %c0_i32 = arith.constant 0 : i32
    %c0_i32_0 = arith.constant 0 : i32
    %c0_i32_1 = arith.constant 0 : i32
    return %c0_i32, %c0_i32_0, %arg0 : i32, i32, i32
  }
  func.func @transform_1(%arg0: i32) -> (i32, i32, i32) {
    %c0_i32 = arith.constant 0 : i32
    %c0_i32_0 = arith.constant 0 : i32
    %c0_i32_1 = arith.constant 0 : i32
    return %c0_i32, %c0_i32_0, %arg0 : i32, i32, i32
  }
  func.func @transform_2(%arg0: i32) -> i32 {
    %c0_i32 = arith.constant 0 : i32
    %c0_i32_0 = arith.constant 0 : i32
    return %c0_i32 : i32
  }
  func.func @transform_3(%arg0: i32) -> (i32, i32, i32) {
    %c0_i32 = arith.constant 0 : i32
    %c0_i32_0 = arith.constant 0 : i32
    %c0_i32_1 = arith.constant 0 : i32
    return %arg0, %c0_i32, %c0_i32_0 : i32, i32, i32
  }
}

</mosaic_0001>

<llo_original>
// kernel: tpu_custom_call.1
$region0: #{tpu_custom_call.1}
  #allocation0 [shape = 'u32[]', space=smem, size = 0x4, offset = 0x4, fixed_abs, tag = 'smem constant byte address 0x4 - core index']
  #allocation1 [shape = 'u32[144,128]{1,0:T(1,128)}', space=vmem, size = 0x12000, scoped, tag = 'internal scratch']
  %s0 = inlined_call_operand.hbm [shape: f32[3,196,256], index: 0, kind: input, shape index: {}]
  %s1 = inlined_call_operand.hbm [shape: f32[5,196,256], index: 1, kind: input, shape index: {}]
  %s2 = inlined_call_operand.vmem [shape: f32[4], index: 2, kind: input, shape index: {}]
  %s3 = inlined_call_operand.vmem [shape: f32[2,5,128], index: 3, kind: output, shape index: {}]
  %s4 = sld [smem:[#allocation0]]
  $region57: #{tpu_custom_call.1} parent=0
    _
  %s6 = ssub.s32 1, %s4
  %s7 = scalar_select 0, %s6, %s4
  $region1: #{tpu_custom_call.1} parent=0
    #allocation2 [shape = 'u8[614400]{0}', space=vmem, size = 0x96000, scoped, tag = 'input window, operand 0']
    #allocation3 [shape = 's32[2]{0}', space=sflag, size = 0x8, scoped, tag = 'scoped memory for tpu_custom_call.1']
    #allocation4 [shape = 's32[2]{0}', space=sflag, size = 0x8, scoped, tag = 'scoped memory for tpu_custom_call.1']
    #allocation5 [shape = 'u8[1024000]{0}', space=vmem, size = 0xfa000, scoped, tag = 'input window, operand 1']
    #allocation6 [shape = 's32[2]{0}', space=sflag, size = 0x8, scoped, tag = 'scoped memory for tpu_custom_call.1']
    #allocation7 [shape = 'u8[512]{0}', space=smem, size = 0x200, scoped, tag = 'input window, operand 2, single buffered']
    %8 = vsyncpa [#allocation3], 0
    %s9 = scalar_lea.sflag [#allocation3], 1
    %10 = vsyncpa %s9, 0
    %11 = vsyncpa [#allocation6], 0
    %s12 = scalar_lea.sflag [#allocation6], 1
    %13 = vsyncpa %s12, 0
    %14 = vsyncpa [#allocation4], 0
    loop: start=0, step=1, limit=4
    $region2: #{tpu_custom_call.1} parent=1 // loop_pre_header
      _
    $region3: #{tpu_custom_call.1} parent=1 // loop_header
      %s16 = sphi 0, %s20
      %p17 = scmp.ge.s32.totalorder %s16, 4
      %s26 = sphi 0, %s28
      %s29 = sphi 0, %s26
      %s30 = sphi 0, %s29
      %s46 = sphi 0, %s30
      %s52 = sphi 0, %s54
      %s55 = sphi 0, %s52
      %s56 = sphi 0, %s55
      %s72 = sphi 0, %s56
      %s76 = sphi 0, %s76
      %s78 = sphi 0, %s76
      %s79 = sphi 0, %s78
      %s93 = sphi 0, %s79
      %s99 = sphi 0, %s101
      %s102 = sphi 0, %s99
      %s103 = sphi 0, %s102
      %s119 = sphi 0, %s103
    $region4: #{tpu_custom_call.1} parent=1 // loop_header_branch
      %19 = sbr.rel (%p17) target = $region8
    $region5: #{tpu_custom_call.1} parent=1 // loop_body
      %s21 = ssub.s32 %s16, 1
      %s22 = ssub.s32 %s16, 2
      %s23 = sadd.s32 %s16, 1
      %s24 = ssub.s32 %s16, %s23
      %p25 = scmp.eq.s32.totalorder %s24, 0
      %s27 = sadd.s32 %s26, 1
      %s28 = scalar_select %p25, %s26, %s27
      %p31 = pneg %p25
      %p32 = scmp.eq.s32.totalorder %s16, 1
      %p33 = por %p31, %p32
      %p34 = scmp.ne.s32.totalorder %s26, %s29
      %p35 = scmp.eq.s32.totalorder %s16, 0
      %p36 = por %p34, %p35
      %p37 = scmp.ne.s32.totalorder %s26, %s29
      %p38 = scmp.eq.s32.totalorder %s21, 1
      %p39 = por %p37, %p38
      %p40 = scmp.ne.s32.totalorder %s29, %s30
      %p41 = scmp.eq.s32.totalorder %s21, 0
      %p42 = por %p40, %p41
      %p43 = scmp.ne.s32.totalorder %s29, %s30
      %p44 = scmp.eq.s32.totalorder %s22, 1
      %p45 = por %p43, %p44
      %p47 = scmp.ne.s32.totalorder %s30, %s46
      %p48 = scmp.eq.s32.totalorder %s22, 0
      %p49 = por %p47, %p48
      %s50 = ssub.s32 %s16, %s23
      %p51 = scmp.eq.s32.totalorder %s50, 0
      %s53 = sadd.s32 %s52, 1
      %s54 = scalar_select %p51, %s52, %s53
      %p57 = pneg %p51
      %p58 = scmp.eq.s32.totalorder %s16, 1
      %p59 = por %p57, %p58
      %p60 = scmp.ne.s32.totalorder %s52, %s55
      %p61 = scmp.eq.s32.totalorder %s16, 0
      %p62 = por %p60, %p61
      %p63 = scmp.ne.s32.totalorder %s52, %s55
      %p64 = scmp.eq.s32.totalorder %s21, 1
      %p65 = por %p63, %p64
      %p66 = scmp.ne.s32.totalorder %s55, %s56
      %p67 = scmp.eq.s32.totalorder %s21, 0
      %p68 = por %p66, %p67
      %p69 = scmp.ne.s32.totalorder %s55, %s56
      %p70 = scmp.eq.s32.totalorder %s22, 1
      %p71 = por %p69, %p70
      %p73 = scmp.ne.s32.totalorder %s56, %s72
      %p74 = scmp.eq.s32.totalorder %s22, 0
      %p75 = por %p73, %p74
      %s77 = sadd.s32 %s76, 1
      %p80 = scmp.eq.s32.totalorder %s16, 1
      %p81 = scmp.ne.s32.totalorder %s76, %s78
      %p82 = scmp.eq.s32.totalorder %s16, 0
      %p83 = por %p81, %p82
      %p84 = scmp.ne.s32.totalorder %s76, %s78
      %p85 = scmp.eq.s32.totalorder %s21, 1
      %p86 = por %p84, %p85
      %p87 = scmp.ne.s32.totalorder %s78, %s79
      %p88 = scmp.eq.s32.totalorder %s21, 0
      %p89 = por %p87, %p88
      %p90 = scmp.ne.s32.totalorder %s78, %s79
      %p91 = scmp.eq.s32.totalorder %s22, 1
      %p92 = por %p90, %p91
      %p94 = scmp.ne.s32.totalorder %s79, %s93
      %p95 = scmp.eq.s32.totalorder %s22, 0
      %p96 = por %p94, %p95
      %s97 = ssub.s32 %s16, %s23
      %p98 = scmp.eq.s32.totalorder %s97, 0
      %s100 = sadd.s32 %s99, 1
      %s101 = scalar_select %p98, %s99, %s100
      %p104 = pneg %p98
      %p105 = scmp.eq.s32.totalorder %s16, 1
      %p106 = por %p104, %p105
      %p107 = scmp.ne.s32.totalorder %s99, %s102
      %p108 = scmp.eq.s32.totalorder %s16, 0
      %p109 = por %p107, %p108
      %p110 = scmp.ne.s32.totalorder %s99, %s102
      %p111 = scmp.eq.s32.totalorder %s21, 1
      %p112 = por %p110, %p111
      %p113 = scmp.ne.s32.totalorder %s102, %s103
      %p114 = scmp.eq.s32.totalorder %s21, 0
      %p115 = por %p113, %p114
      %p116 = scmp.ne.s32.totalorder %s102, %s103
      %p117 = scmp.eq.s32.totalorder %s22, 1
      %p118 = por %p116, %p117
      %p120 = scmp.ne.s32.totalorder %s103, %s119
      %p121 = scmp.eq.s32.totalorder %s22, 0
      %p122 = por %p120, %p121
      %p123 = scmp.le.s32.totalorder 1, %s16
      %p124 = scmp.lt.s32.totalorder %s16, 3
      %p125 = pnand %p123, %p124
      %p126 = pneg %p125
      // Predicated region
      $region9: #{tpu_custom_call.1} parent=5 // pred_check
        _
      $region10: #{tpu_custom_call.1} parent=5 // pred_check_branch
        %128 = sbr.rel (%p125) target = $region12
      $region11: #{tpu_custom_call.1} parent=5 // pred_region
        %s129 = ssub.s32 %s16, 1
        // Predicated region
        $region13: #{tpu_custom_call.1} parent=11 // pred_check
          %p130 = pneg %p89
        $region14: #{tpu_custom_call.1} parent=11 // pred_check_branch
          %132 = sbr.rel (%p130) target = $region16
        $region15: #{tpu_custom_call.1} parent=11 // pred_region
          %s134 = ssub.s32 16, 16
          %135 = vsyncadd [#allocation4], %s134
          %s137 = sshll.u32 %s2, 4
          %s138 = int_to_ptr.vmem [resolvable:$true] %s137
          %140 = dma.vmem_to_smem %s138, 16, [#allocation7], [#allocation4]
        $region16: #{tpu_custom_call.1} parent=11 // pred_fallthru
          _
      $region12: #{tpu_custom_call.1} parent=5 // pred_fallthru
        _
      %p141 = scmp.lt.s32.totalorder %s16, 2
      // Predicated region
      $region17: #{tpu_custom_call.1} parent=5 // pred_check
        %p142 = pneg %p141
      $region18: #{tpu_custom_call.1} parent=5 // pred_check_branch
        %144 = sbr.rel (%p142) target = $region20
      $region19: #{tpu_custom_call.1} parent=5 // pred_region
        // Predicated region
        $region21: #{tpu_custom_call.1} parent=19 // pred_check
          %p145 = pneg %p36
        $region22: #{tpu_custom_call.1} parent=19 // pred_check_branch
          %147 = sbr.rel (%p145) target = $region24
        $region23: #{tpu_custom_call.1} parent=19 // pred_region
          %s148 = sand.u32 %s26, 1
          %s149 = scalar_lea.sflag [#allocation3], %s148
          %s150 = sand.u32 %s26, 1
          %s151 = smul.addr %s150, 600
          %s152 = scalar_lea.vmem [#allocation2], %s151
          %s154 = ssub.s32 9600, 9600
          %155 = vsyncadd %s149, %s154
          %s156 = smul.addr %s16, 128
          %s157 = scalar_lea.hbm %s0, %s156
          %s158 = sshll.u32 %s152, 4
          %s159 = int_to_ptr.vmem [resolvable:$true] %s158
          %164 = dma.hbm_to_vmem [thread:$0]  %s157, 9600, %s159, %s149, 256, 128, 8
        $region24: #{tpu_custom_call.1} parent=19 // pred_fallthru
          _
        // Predicated region
        $region25: #{tpu_custom_call.1} parent=19 // pred_check
          %p165 = pneg %p62
        $region26: #{tpu_custom_call.1} parent=19 // pred_check_branch
          %167 = sbr.rel (%p165) target = $region28
        $region27: #{tpu_custom_call.1} parent=19 // pred_region
          %s168 = sand.u32 %s52, 1
          %s169 = scalar_lea.sflag [#allocation6], %s168
          %s170 = sand.u32 %s52, 1
          %s171 = smul.addr %s170, 1000
          %s172 = scalar_lea.vmem [#allocation5], %s171
          %s174 = ssub.s32 16000, 16000
          %175 = vsyncadd %s169, %s174
          %s176 = smul.addr %s16, 128
          %s177 = scalar_lea.hbm %s1, %s176
          %s178 = sshll.u32 %s172, 4
          %s179 = int_to_ptr.vmem [resolvable:$true] %s178
          %184 = dma.hbm_to_vmem [thread:$0]  %s177, 16000, %s179, %s169, 256, 128, 8
        $region28: #{tpu_custom_call.1} parent=19 // pred_fallthru
          _
      $region20: #{tpu_custom_call.1} parent=5 // pred_fallthru
        _
      %p185 = scmp.le.s32.totalorder 1, %s16
      %p186 = scmp.lt.s32.totalorder %s16, 3
      %p187 = pnand %p185, %p186
      %p188 = pneg %p187
      // Predicated region
      $region29: #{tpu_custom_call.1} parent=5 // pred_check
        _
      $region30: #{tpu_custom_call.1} parent=5 // pred_check_branch
        %190 = sbr.rel (%p187) target = $region32
      $region31: #{tpu_custom_call.1} parent=5 // pred_region
        %s191 = ssub.s32 %s16, 1
        %s192 = sand.u32 %s29, 1
        %s193 = scalar_lea.sflag [#allocation3], %s192
        %s194 = sand.u32 %s29, 1
        %s195 = smul.addr %s194, 600
        %s196 = scalar_lea.vmem [#allocation2], %s195
        // Predicated region
        $region33: #{tpu_custom_call.1} parent=31 // pred_check
          %p197 = pneg %p42
        $region34: #{tpu_custom_call.1} parent=31 // pred_check_branch
          %199 = sbr.rel (%p197) target = $region36
        $region35: #{tpu_custom_call.1} parent=31 // pred_region
          %200 = dma.done %s193, 9600
        $region36: #{tpu_custom_call.1} parent=31 // pred_fallthru
          _
        %s201 = sand.u32 %s55, 1
        %s202 = scalar_lea.sflag [#allocation6], %s201
        %s203 = sand.u32 %s55, 1
        %s204 = smul.addr %s203, 1000
        %s205 = scalar_lea.vmem [#allocation5], %s204
        // Predicated region
        $region37: #{tpu_custom_call.1} parent=31 // pred_check
          %p206 = pneg %p68
        $region38: #{tpu_custom_call.1} parent=31 // pred_check_branch
          %208 = sbr.rel (%p206) target = $region40
        $region39: #{tpu_custom_call.1} parent=31 // pred_region
          %209 = dma.done %s202, 16000
        $region40: #{tpu_custom_call.1} parent=31 // pred_fallthru
          _
        // Predicated region
        $region41: #{tpu_custom_call.1} parent=31 // pred_check
          %p210 = pneg %p89
        $region42: #{tpu_custom_call.1} parent=31 // pred_check_branch
          %212 = sbr.rel (%p210) target = $region44
        $region43: #{tpu_custom_call.1} parent=31 // pred_region
          %213 = dma.done [#allocation4], 16
        $region44: #{tpu_custom_call.1} parent=31 // pred_fallthru
          _
        %214 = sfence
        %s215 = sand.u32 %s29, 1
        %s216 = scalar_lea.sflag [#allocation3], %s215
        %s217 = sand.u32 %s29, 1
        %s218 = smul.addr %s217, 600
        %s219 = scalar_lea.vmem [#allocation2], %s218
        %p220 = pneg %p42
        %p221 = pneg %p39
        %s222 = sand.u32 %s55, 1
        %s223 = scalar_lea.sflag [#allocation6], %s222
        %s224 = sand.u32 %s55, 1
        %s225 = smul.addr %s224, 1000
        %s226 = scalar_lea.vmem [#allocation5], %s225
        %p227 = pneg %p68
        %p228 = pneg %p65
        %p229 = pneg %p89
        %p230 = pneg %p86
        %p231 = pneg %p115
        %p232 = pneg %p112
        %p233 = scmp.lt.s32.totalorder %s21, 1
        %s234 = scalar_select %p233, %s21, 1
        %s235 = smul.addr %s234, 8
        %s236 = scalar_lea.vmem %s3, %s235
        %p237 = scmp.lt.s32.totalorder %s21, 1
        %s238 = scalar_select %p237, %s21, 1
        %s239 = smul.addr %s238, 8
        %s240 = scalar_lea.vmem %s3, %s239
        %s241 = sld [smem:[#allocation7]]
        %v242 = vld [vmem:[%s196] sm:$0xff]
        %v243 = vld [vmem:[%s196 + $0x8] sm:$0xff]
        %v244 = vld [vmem:[%s196 + $0x10] sm:$0xff]
        %v245 = vld [vmem:[%s196 + $0x18] sm:$0xff]
        %v246 = vld [vmem:[%s196 + $0x20] sm:$0xff]
        %v247 = vld [vmem:[%s196 + $0x28] sm:$0xff]
        %v248 = vld [vmem:[%s196 + $0x30] sm:$0xff]
        %v249 = vld [vmem:[%s196 + $0x38] sm:$0xff]
        %v250 = vld [vmem:[%s196 + $0x40] sm:$0xff]
        %v251 = vld [vmem:[%s196 + $0x48] sm:$0xff]
        %v252 = vld [vmem:[%s196 + $0x50] sm:$0xff]
        %v253 = vld [vmem:[%s196 + $0x58] sm:$0xff]
        %v254 = vld [vmem:[%s196 + $0x60] sm:$0xff]
        %v255 = vld [vmem:[%s196 + $0x68] sm:$0xff]
        %v256 = vld [vmem:[%s196 + $0x70] sm:$0xff]
        %v257 = vld [vmem:[%s196 + $0x78] sm:$0xff]
        %v258 = vld [vmem:[%s196 + $0x80] sm:$0xff]
        %v259 = vld [vmem:[%s196 + $0x88] sm:$0xff]
        %v260 = vld [vmem:[%s196 + $0x90] sm:$0xff]
        %v261 = vld [vmem:[%s196 + $0x98] sm:$0xff]
        %v262 = vld [vmem:[%s196 + $0xa0] sm:$0xff]
        %v263 = vld [vmem:[%s196 + $0xa8] sm:$0xff]
        %v264 = vld [vmem:[%s196 + $0xb0] sm:$0xff]
        %v265 = vld [vmem:[%s196 + $0xb8] sm:$0xff]
        %v266 = vld [vmem:[%s196 + $0xc0] sm:$0xf]
        %v267 = vstv %s241
        %v268 = vmul.f32 %v267, %v242
        %v269 = vmul.f32 %v267, %v243
        %v270 = vmul.f32 %v267, %v244
        %v271 = vmul.f32 %v267, %v245
        %v272 = vmul.f32 %v267, %v246
        %v273 = vmul.f32 %v267, %v247
        %v274 = vmul.f32 %v267, %v248
        %v275 = vmul.f32 %v267, %v249
        %v276 = vmul.f32 %v267, %v250
        %v277 = vmul.f32 %v267, %v251
        %v278 = vmul.f32 %v267, %v252
        %v279 = vmul.f32 %v267, %v253
        %v280 = vmul.f32 %v267, %v254
        %v281 = vmul.f32 %v267, %v255
        %v282 = vmul.f32 %v267, %v256
        %v283 = vmul.f32 %v267, %v257
        %v284 = vmul.f32 %v267, %v258
        %v285 = vmul.f32 %v267, %v259
        %v286 = vmul.f32 %v267, %v260
        %v287 = vmul.f32 %v267, %v261
        %v288 = vmul.f32 %v267, %v262
        %v289 = vmul.f32 %v267, %v263
        %v290 = vmul.f32 %v267, %v264
        %v291 = vmul.f32 %v267, %v265
        %v292 = vmul.f32 %v267, %v266
        %s293 = sld [smem:[#allocation7 + $0x1]]
        %s294 = scalar_lea.vmem %s196, 200 [#allocation2]
        %v295 = vld [vmem:[%s294] sm:$0xff]
        %v296 = vld [vmem:[%s294 + $0x8] sm:$0xff]
        %v297 = vld [vmem:[%s294 + $0x10] sm:$0xff]
        %v298 = vld [vmem:[%s294 + $0x18] sm:$0xff]
        %v299 = vld [vmem:[%s294 + $0x20] sm:$0xff]
        %v300 = vld [vmem:[%s294 + $0x28] sm:$0xff]
        %v301 = vld [vmem:[%s294 + $0x30] sm:$0xff]
        %v302 = vld [vmem:[%s294 + $0x38] sm:$0xff]
        %v303 = vld [vmem:[%s294 + $0x40] sm:$0xff]
        %v304 = vld [vmem:[%s294 + $0x48] sm:$0xff]
        %v305 = vld [vmem:[%s294 + $0x50] sm:$0xff]
        %v306 = vld [vmem:[%s294 + $0x58] sm:$0xff]
        %v307 = vld [vmem:[%s294 + $0x60] sm:$0xff]
        %v308 = vld [vmem:[%s294 + $0x68] sm:$0xff]
        %v309 = vld [vmem:[%s294 + $0x70] sm:$0xff]
        %v310 = vld [vmem:[%s294 + $0x78] sm:$0xff]
        %v311 = vld [vmem:[%s294 + $0x80] sm:$0xff]
        %v312 = vld [vmem:[%s294 + $0x88] sm:$0xff]
        %v313 = vld [vmem:[%s294 + $0x90] sm:$0xff]
        %v314 = vld [vmem:[%s294 + $0x98] sm:$0xff]
        %v315 = vld [vmem:[%s294 + $0xa0] sm:$0xff]
        %v316 = vld [vmem:[%s294 + $0xa8] sm:$0xff]
        %v317 = vld [vmem:[%s294 + $0xb0] sm:$0xff]
        %v318 = vld [vmem:[%s294 + $0xb8] sm:$0xff]
        %v319 = vld [vmem:[%s294 + $0xc0] sm:$0xf]
        %v320 = vstv %s293
        %v321 = vmul.f32 %v320, %v295
        %v322 = vmul.f32 %v320, %v296
        %v323 = vmul.f32 %v320, %v297
        %v324 = vmul.f32 %v320, %v298
        %v325 = vmul.f32 %v320, %v299
        %v326 = vmul.f32 %v320, %v300
        %v327 = vmul.f32 %v320, %v301
        %v328 = vmul.f32 %v320, %v302
        %v329 = vmul.f32 %v320, %v303
        %v330 = vmul.f32 %v320, %v304
        %v331 = vmul.f32 %v320, %v305
        %v332 = vmul.f32 %v320, %v306
        %v333 = vmul.f32 %v320, %v307
        %v334 = vmul.f32 %v320, %v308
        %v335 = vmul.f32 %v320, %v309
        %v336 = vmul.f32 %v320, %v310
        %v337 = vmul.f32 %v320, %v311
        %v338 = vmul.f32 %v320, %v312
        %v339 = vmul.f32 %v320, %v313
        %v340 = vmul.f32 %v320, %v314
        %v341 = vmul.f32 %v320, %v315
        %v342 = vmul.f32 %v320, %v316
        %v343 = vmul.f32 %v320, %v317
        %v344 = vmul.f32 %v320, %v318
        %v345 = vmul.f32 %v320, %v319
        %v346 = vadd.f32 %v268, %v321
        %v347 = vadd.f32 %v269, %v322
        %v348 = vadd.f32 %v270, %v323
        %v349 = vadd.f32 %v271, %v324
        %v350 = vadd.f32 %v272, %v325
        %v351 = vadd.f32 %v273, %v326
        %v352 = vadd.f32 %v274, %v327
        %v353 = vadd.f32 %v275, %v328
        %v354 = vadd.f32 %v276, %v329
        %v355 = vadd.f32 %v277, %v330
        %v356 = vadd.f32 %v278, %v331
        %v357 = vadd.f32 %v279, %v332
        %v358 = vadd.f32 %v280, %v333
        %v359 = vadd.f32 %v281, %v334
        %v360 = vadd.f32 %v282, %v335
        %v361 = vadd.f32 %v283, %v336
        %v362 = vadd.f32 %v284, %v337
        %v363 = vadd.f32 %v285, %v338
        %v364 = vadd.f32 %v286, %v339
        %v365 = vadd.f32 %v287, %v340
        %v366 = vadd.f32 %v288, %v341
        %v367 = vadd.f32 %v289, %v342
        %v368 = vadd.f32 %v290, %v343
        %v369 = vadd.f32 %v291, %v344
        %v370 = vadd.f32 %v292, %v345
        %s371 = sld [smem:[#allocation7 + $0x2]]
        %s372 = scalar_lea.vmem %s196, 400 [#allocation2]
        %v373 = vld [vmem:[%s372] sm:$0xff]
        %v374 = vld [vmem:[%s372 + $0x8] sm:$0xff]
        %v375 = vld [vmem:[%s372 + $0x10] sm:$0xff]
        %v376 = vld [vmem:[%s372 + $0x18] sm:$0xff]
        %v377 = vld [vmem:[%s372 + $0x20] sm:$0xff]
        %v378 = vld [vmem:[%s372 + $0x28] sm:$0xff]
        %v379 = vld [vmem:[%s372 + $0x30] sm:$0xff]
        %v380 = vld [vmem:[%s372 + $0x38] sm:$0xff]
        %v381 = vld [vmem:[%s372 + $0x40] sm:$0xff]
        %v382 = vld [vmem:[%s372 + $0x48] sm:$0xff]
        %v383 = vld [vmem:[%s372 + $0x50] sm:$0xff]
        %v384 = vld [vmem:[%s372 + $0x58] sm:$0xff]
        %v385 = vld [vmem:[%s372 + $0x60] sm:$0xff]
        %v386 = vld [vmem:[%s372 + $0x68] sm:$0xff]
        %v387 = vld [vmem:[%s372 + $0x70] sm:$0xff]
        %v388 = vld [vmem:[%s372 + $0x78] sm:$0xff]
        %v389 = vld [vmem:[%s372 + $0x80] sm:$0xff]
        %v390 = vld [vmem:[%s372 + $0x88] sm:$0xff]
        %v391 = vld [vmem:[%s372 + $0x90] sm:$0xff]
        %v392 = vld [vmem:[%s372 + $0x98] sm:$0xff]
        %v393 = vld [vmem:[%s372 + $0xa0] sm:$0xff]
        %v394 = vld [vmem:[%s372 + $0xa8] sm:$0xff]
        %v395 = vld [vmem:[%s372 + $0xb0] sm:$0xff]
        %v396 = vld [vmem:[%s372 + $0xb8] sm:$0xff]
        %v397 = vld [vmem:[%s372 + $0xc0] sm:$0xf]
        %v398 = vstv %s371
        %v399 = vmul.f32 %v398, %v373
        %v400 = vmul.f32 %v398, %v374
        %v401 = vmul.f32 %v398, %v375
        %v402 = vmul.f32 %v398, %v376
        %v403 = vmul.f32 %v398, %v377
        %v404 = vmul.f32 %v398, %v378
        %v405 = vmul.f32 %v398, %v379
        %v406 = vmul.f32 %v398, %v380
        %v407 = vmul.f32 %v398, %v381
        %v408 = vmul.f32 %v398, %v382
        %v409 = vmul.f32 %v398, %v383
        %v410 = vmul.f32 %v398, %v384
        %v411 = vmul.f32 %v398, %v385
        %v412 = vmul.f32 %v398, %v386
        %v413 = vmul.f32 %v398, %v387
        %v414 = vmul.f32 %v398, %v388
        %v415 = vmul.f32 %v398, %v389
        %v416 = vmul.f32 %v398, %v390
        %v417 = vmul.f32 %v398, %v391
        %v418 = vmul.f32 %v398, %v392
        %v419 = vmul.f32 %v398, %v393
        %v420 = vmul.f32 %v398, %v394
        %v421 = vmul.f32 %v398, %v395
        %v422 = vmul.f32 %v398, %v396
        %v423 = vmul.f32 %v398, %v397
        %v424 = vadd.f32 %v346, %v399
        %v425 = vadd.f32 %v347, %v400
        %v426 = vadd.f32 %v348, %v401
        %v427 = vadd.f32 %v349, %v402
        %v428 = vadd.f32 %v350, %v403
        %v429 = vadd.f32 %v351, %v404
        %v430 = vadd.f32 %v352, %v405
        %v431 = vadd.f32 %v353, %v406
        %v432 = vadd.f32 %v354, %v407
        %v433 = vadd.f32 %v355, %v408
        %v434 = vadd.f32 %v356, %v409
        %v435 = vadd.f32 %v357, %v410
        %v436 = vadd.f32 %v358, %v411
        %v437 = vadd.f32 %v359, %v412
        %v438 = vadd.f32 %v360, %v413
        %v439 = vadd.f32 %v361, %v414
        %v440 = vadd.f32 %v362, %v415
        %v441 = vadd.f32 %v363, %v416
        %v442 = vadd.f32 %v364, %v417
        %v443 = vadd.f32 %v365, %v418
        %v444 = vadd.f32 %v366, %v419
        %v445 = vadd.f32 %v367, %v420
        %v446 = vadd.f32 %v368, %v421
        %v447 = vadd.f32 %v369, %v422
        %v448 = vadd.f32 %v370, %v423
        %s449 = sld [smem:[#allocation7 + $0x3]]
        %v450 = vstv %s449
        %v451 = vadd.f32 %v424, %v450
        %v452 = vadd.f32 %v425, %v450
        %v453 = vadd.f32 %v426, %v450
        %v454 = vadd.f32 %v427, %v450
        %v455 = vadd.f32 %v428, %v450
        %v456 = vadd.f32 %v429, %v450
        %v457 = vadd.f32 %v430, %v450
        %v458 = vadd.f32 %v431, %v450
        %v459 = vadd.f32 %v432, %v450
        %v460 = vadd.f32 %v433, %v450
        %v461 = vadd.f32 %v434, %v450
        %v462 = vadd.f32 %v435, %v450
        %v463 = vadd.f32 %v436, %v450
        %v464 = vadd.f32 %v437, %v450
        %v465 = vadd.f32 %v438, %v450
        %v466 = vadd.f32 %v439, %v450
        %v467 = vadd.f32 %v440, %v450
        %v468 = vadd.f32 %v441, %v450
        %v469 = vadd.f32 %v442, %v450
        %v470 = vadd.f32 %v443, %v450
        %v471 = vadd.f32 %v444, %v450
        %v472 = vadd.f32 %v445, %v450
        %v473 = vadd.f32 %v446, %v450
        %v474 = vadd.f32 %v447, %v450
        %v475 = vadd.f32 %v448, %v450
        %v476 = vld [vmem:[%s205] sm:$0xff]
        %v477 = vld [vmem:[%s205 + $0x8] sm:$0xff]
        %v478 = vld [vmem:[%s205 + $0x10] sm:$0xff]
        %v479 = vld [vmem:[%s205 + $0x18] sm:$0xff]
        %v480 = vld [vmem:[%s205 + $0x20] sm:$0xff]
        %v481 = vld [vmem:[%s205 + $0x28] sm:$0xff]
        %v482 = vld [vmem:[%s205 + $0x30] sm:$0xff]
        %v483 = vld [vmem:[%s205 + $0x38] sm:$0xff]
        %v484 = vld [vmem:[%s205 + $0x40] sm:$0xff]
        %v485 = vld [vmem:[%s205 + $0x48] sm:$0xff]
        %v486 = vld [vmem:[%s205 + $0x50] sm:$0xff]
        %v487 = vld [vmem:[%s205 + $0x58] sm:$0xff]
        %v488 = vld [vmem:[%s205 + $0x60] sm:$0xff]
        %v489 = vld [vmem:[%s205 + $0x68] sm:$0xff]
        %v490 = vld [vmem:[%s205 + $0x70] sm:$0xff]
        %v491 = vld [vmem:[%s205 + $0x78] sm:$0xff]
        %v492 = vld [vmem:[%s205 + $0x80] sm:$0xff]
        %v493 = vld [vmem:[%s205 + $0x88] sm:$0xff]
        %v494 = vld [vmem:[%s205 + $0x90] sm:$0xff]
        %v495 = vld [vmem:[%s205 + $0x98] sm:$0xff]
        %v496 = vld [vmem:[%s205 + $0xa0] sm:$0xff]
        %v497 = vld [vmem:[%s205 + $0xa8] sm:$0xff]
        %v498 = vld [vmem:[%s205 + $0xb0] sm:$0xff]
        %v499 = vld [vmem:[%s205 + $0xb8] sm:$0xff]
        %v500 = vld [vmem:[%s205 + $0xc0] sm:$0xf]
        %v501 = vmul.f32 %v451, %v476
        %v502 = vmul.f32 %v452, %v477
        %v503 = vmul.f32 %v453, %v478
        %v504 = vmul.f32 %v454, %v479
        %v505 = vmul.f32 %v455, %v480
        %v506 = vmul.f32 %v456, %v481
        %v507 = vmul.f32 %v457, %v482
        %v508 = vmul.f32 %v458, %v483
        %v509 = vmul.f32 %v459, %v484
        %v510 = vmul.f32 %v460, %v485
        %v511 = vmul.f32 %v461, %v486
        %v512 = vmul.f32 %v462, %v487
        %v513 = vmul.f32 %v463, %v488
        %v514 = vmul.f32 %v464, %v489
        %v515 = vmul.f32 %v465, %v490
        %v516 = vmul.f32 %v466, %v491
        %v517 = vmul.f32 %v467, %v492
        %v518 = vmul.f32 %v468, %v493
        %v519 = vmul.f32 %v469, %v494
        %v520 = vmul.f32 %v470, %v495
        %v521 = vmul.f32 %v471, %v496
        %v522 = vmul.f32 %v472, %v497
        %v523 = vmul.f32 %v473, %v498
        %v524 = vmul.f32 %v474, %v499
        %v525 = vmul.f32 %v475, %v500
        %v526 = vadd.f32 %v501, %v502
        %v527 = vadd.f32 %v526, %v503
        %v528 = vadd.f32 %v527, %v504
        %v529 = vadd.f32 %v528, %v505
        %v530 = vadd.f32 %v529, %v506
        %v531 = vadd.f32 %v530, %v507
        %v532 = vadd.f32 %v531, %v508
        %v533 = vadd.f32 %v532, %v509
        %v534 = vadd.f32 %v533, %v510
        %v535 = vadd.f32 %v534, %v511
        %v536 = vadd.f32 %v535, %v512
        %v537 = vadd.f32 %v536, %v513
        %v538 = vadd.f32 %v537, %v514
        %v539 = vadd.f32 %v538, %v515
        %v540 = vadd.f32 %v539, %v516
        %v541 = vadd.f32 %v540, %v517
        %v542 = vadd.f32 %v541, %v518
        %v543 = vadd.f32 %v542, %v519
        %v544 = vadd.f32 %v543, %v520
        %v545 = vadd.f32 %v544, %v521
        %v546 = vadd.f32 %v545, %v522
        %v547 = vadd.f32 %v546, %v523
        %v548 = vadd.f32 %v547, %v524
        %vm549 = vcmask 1043456
        %v550 = vsel %vm549, %v525, 0.0
        %v551 = vadd.f32 %v548, %v550
        %v552 = vrot.slane %v551, 4
        %v553 = vadd.f32 %v551, %v552
        %v554 = vrot.slane %v553, 2
        %v555 = vadd.f32 %v553, %v554
        %v556 = vrot.slane %v555, 1
        %v557 = vadd.f32 %v555, %v556
        %558 = vst [vmem:[%s240] sm:$0x1] %v557
        %s559 = scalar_lea.vmem %s205, 200 [#allocation5]
        %v560 = vld [vmem:[%s559] sm:$0xff]
        %v561 = vld [vmem:[%s559 + $0x8] sm:$0xff]
        %v562 = vld [vmem:[%s559 + $0x10] sm:$0xff]
        %v563 = vld [vmem:[%s559 + $0x18] sm:$0xff]
        %v564 = vld [vmem:[%s559 + $0x20] sm:$0xff]
        %v565 = vld [vmem:[%s559 + $0x28] sm:$0xff]
        %v566 = vld [vmem:[%s559 + $0x30] sm:$0xff]
        %v567 = vld [vmem:[%s559 + $0x38] sm:$0xff]
        %v568 = vld [vmem:[%s559 + $0x40] sm:$0xff]
        %v569 = vld [vmem:[%s559 + $0x48] sm:$0xff]
        %v570 = vld [vmem:[%s559 + $0x50] sm:$0xff]
        %v571 = vld [vmem:[%s559 + $0x58] sm:$0xff]
        %v572 = vld [vmem:[%s559 + $0x60] sm:$0xff]
        %v573 = vld [vmem:[%s559 + $0x68] sm:$0xff]
        %v574 = vld [vmem:[%s559 + $0x70] sm:$0xff]
        %v575 = vld [vmem:[%s559 + $0x78] sm:$0xff]
        %v576 = vld [vmem:[%s559 + $0x80] sm:$0xff]
        %v577 = vld [vmem:[%s559 + $0x88] sm:$0xff]
        %v578 = vld [vmem:[%s559 + $0x90] sm:$0xff]
        %v579 = vld [vmem:[%s559 + $0x98] sm:$0xff]
        %v580 = vld [vmem:[%s559 + $0xa0] sm:$0xff]
        %v581 = vld [vmem:[%s559 + $0xa8] sm:$0xff]
        %v582 = vld [vmem:[%s559 + $0xb0] sm:$0xff]
        %v583 = vld [vmem:[%s559 + $0xb8] sm:$0xff]
        %v584 = vld [vmem:[%s559 + $0xc0] sm:$0xf]
        %v585 = vmul.f32 %v451, %v560
        %v586 = vmul.f32 %v452, %v561
        %v587 = vmul.f32 %v453, %v562
        %v588 = vmul.f32 %v454, %v563
        %v589 = vmul.f32 %v455, %v564
        %v590 = vmul.f32 %v456, %v565
        %v591 = vmul.f32 %v457, %v566
        %v592 = vmul.f32 %v458, %v567
        %v593 = vmul.f32 %v459, %v568
        %v594 = vmul.f32 %v460, %v569
        %v595 = vmul.f32 %v461, %v570
        %v596 = vmul.f32 %v462, %v571
        %v597 = vmul.f32 %v463, %v572
        %v598 = vmul.f32 %v464, %v573
        %v599 = vmul.f32 %v465, %v574
        %v600 = vmul.f32 %v466, %v575
        %v601 = vmul.f32 %v467, %v576
        %v602 = vmul.f32 %v468, %v577
        %v603 = vmul.f32 %v469, %v578
        %v604 = vmul.f32 %v470, %v579
        %v605 = vmul.f32 %v471, %v580
        %v606 = vmul.f32 %v472, %v581
        %v607 = vmul.f32 %v473, %v582
        %v608 = vmul.f32 %v474, %v583
        %v609 = vmul.f32 %v475, %v584
        %v610 = vadd.f32 %v585, %v586
        %v611 = vadd.f32 %v610, %v587
        %v612 = vadd.f32 %v611, %v588
        %v613 = vadd.f32 %v612, %v589
        %v614 = vadd.f32 %v613, %v590
        %v615 = vadd.f32 %v614, %v591
        %v616 = vadd.f32 %v615, %v592
        %v617 = vadd.f32 %v616, %v593
        %v618 = vadd.f32 %v617, %v594
        %v619 = vadd.f32 %v618, %v595
        %v620 = vadd.f32 %v619, %v596
        %v621 = vadd.f32 %v620, %v597
        %v622 = vadd.f32 %v621, %v598
        %v623 = vadd.f32 %v622, %v599
        %v624 = vadd.f32 %v623, %v600
        %v625 = vadd.f32 %v624, %v601
        %v626 = vadd.f32 %v625, %v602
        %v627 = vadd.f32 %v626, %v603
        %v628 = vadd.f32 %v627, %v604
        %v629 = vadd.f32 %v628, %v605
        %v630 = vadd.f32 %v629, %v606
        %v631 = vadd.f32 %v630, %v607
        %v632 = vadd.f32 %v631, %v608
        %v633 = vsel %vm549, %v609, 0.0
        %v634 = vadd.f32 %v632, %v633
        %v635 = vrot.slane %v634, 4
        %v636 = vadd.f32 %v634, %v635
        %v637 = vrot.slane %v636, 2
        %v638 = vadd.f32 %v636, %v637
        %v639 = vrot.slane %v638, 1
        %v640 = vadd.f32 %v638, %v639
        %641 = vst [vmem:[%s240 + $0x1] sm:$0x1] %v640
        %s642 = scalar_lea.vmem %s205, 400 [#allocation5]
        %v643 = vld [vmem:[%s642] sm:$0xff]
        %v644 = vld [vmem:[%s642 + $0x8] sm:$0xff]
        %v645 = vld [vmem:[%s642 + $0x10] sm:$0xff]
        %v646 = vld [vmem:[%s642 + $0x18] sm:$0xff]
        %v647 = vld [vmem:[%s642 + $0x20] sm:$0xff]
        %v648 = vld [vmem:[%s642 + $0x28] sm:$0xff]
        %v649 = vld [vmem:[%s642 + $0x30] sm:$0xff]
        %v650 = vld [vmem:[%s642 + $0x38] sm:$0xff]
        %v651 = vld [vmem:[%s642 + $0x40] sm:$0xff]
        %v652 = vld [vmem:[%s642 + $0x48] sm:$0xff]
        %v653 = vld [vmem:[%s642 + $0x50] sm:$0xff]
        %v654 = vld [vmem:[%s642 + $0x58] sm:$0xff]
        %v655 = vld [vmem:[%s642 + $0x60] sm:$0xff]
        %v656 = vld [vmem:[%s642 + $0x68] sm:$0xff]
        %v657 = vld [vmem:[%s642 + $0x70] sm:$0xff]
        %v658 = vld [vmem:[%s642 + $0x78] sm:$0xff]
        %v659 = vld [vmem:[%s642 + $0x80] sm:$0xff]
        %v660 = vld [vmem:[%s642 + $0x88] sm:$0xff]
        %v661 = vld [vmem:[%s642 + $0x90] sm:$0xff]
        %v662 = vld [vmem:[%s642 + $0x98] sm:$0xff]
        %v663 = vld [vmem:[%s642 + $0xa0] sm:$0xff]
        %v664 = vld [vmem:[%s642 + $0xa8] sm:$0xff]
        %v665 = vld [vmem:[%s642 + $0xb0] sm:$0xff]
        %v666 = vld [vmem:[%s642 + $0xb8] sm:$0xff]
        %v667 = vld [vmem:[%s642 + $0xc0] sm:$0xf]
        %v668 = vmul.f32 %v451, %v643
        %v669 = vmul.f32 %v452, %v644
        %v670 = vmul.f32 %v453, %v645
        %v671 = vmul.f32 %v454, %v646
        %v672 = vmul.f32 %v455, %v647
        %v673 = vmul.f32 %v456, %v648
        %v674 = vmul.f32 %v457, %v649
        %v675 = vmul.f32 %v458, %v650
        %v676 = vmul.f32 %v459, %v651
        %v677 = vmul.f32 %v460, %v652
        %v678 = vmul.f32 %v461, %v653
        %v679 = vmul.f32 %v462, %v654
        %v680 = vmul.f32 %v463, %v655
        %v681 = vmul.f32 %v464, %v656
        %v682 = vmul.f32 %v465, %v657
        %v683 = vmul.f32 %v466, %v658
        %v684 = vmul.f32 %v467, %v659
        %v685 = vmul.f32 %v468, %v660
        %v686 = vmul.f32 %v469, %v661
        %v687 = vmul.f32 %v470, %v662
        %v688 = vmul.f32 %v471, %v663
        %v689 = vmul.f32 %v472, %v664
        %v690 = vmul.f32 %v473, %v665
        %v691 = vmul.f32 %v474, %v666
        %v692 = vmul.f32 %v475, %v667
        %v693 = vadd.f32 %v668, %v669
        %v694 = vadd.f32 %v693, %v670
        %v695 = vadd.f32 %v694, %v671
        %v696 = vadd.f32 %v695, %v672
        %v697 = vadd.f32 %v696, %v673
        %v698 = vadd.f32 %v697, %v674
        %v699 = vadd.f32 %v698, %v675
        %v700 = vadd.f32 %v699, %v676
        %v701 = vadd.f32 %v700, %v677
        %v702 = vadd.f32 %v701, %v678
        %v703 = vadd.f32 %v702, %v679
        %v704 = vadd.f32 %v703, %v680
        %v705 = vadd.f32 %v704, %v681
        %v706 = vadd.f32 %v705, %v682
        %v707 = vadd.f32 %v706, %v683
        %v708 = vadd.f32 %v707, %v684
        %v709 = vadd.f32 %v708, %v685
        %v710 = vadd.f32 %v709, %v686
        %v711 = vadd.f32 %v710, %v687
        %v712 = vadd.f32 %v711, %v688
        %v713 = vadd.f32 %v712, %v689
        %v714 = vadd.f32 %v713, %v690
        %v715 = vadd.f32 %v714, %v691
        %v716 = vsel %vm549, %v692, 0.0
        %v717 = vadd.f32 %v715, %v716
        %v718 = vrot.slane %v717, 4
        %v719 = vadd.f32 %v717, %v718
        %v720 = vrot.slane %v719, 2
        %v721 = vadd.f32 %v719, %v720
        %v722 = vrot.slane %v721, 1
        %v723 = vadd.f32 %v721, %v722
        %724 = vst [vmem:[%s240 + $0x2] sm:$0x1] %v723
        %s725 = scalar_lea.vmem %s205, 600 [#allocation5]
        %v726 = vld [vmem:[%s725] sm:$0xff]
        %v727 = vld [vmem:[%s725 + $0x8] sm:$0xff]
        %v728 = vld [vmem:[%s725 + $0x10] sm:$0xff]
        %v729 = vld [vmem:[%s725 + $0x18] sm:$0xff]
        %v730 = vld [vmem:[%s725 + $0x20] sm:$0xff]
        %v731 = vld [vmem:[%s725 + $0x28] sm:$0xff]
        %v732 = vld [vmem:[%s725 + $0x30] sm:$0xff]
        %v733 = vld [vmem:[%s725 + $0x38] sm:$0xff]
        %v734 = vld [vmem:[%s725 + $0x40] sm:$0xff]
        %v735 = vld [vmem:[%s725 + $0x48] sm:$0xff]
        %v736 = vld [vmem:[%s725 + $0x50] sm:$0xff]
        %v737 = vld [vmem:[%s725 + $0x58] sm:$0xff]
        %v738 = vld [vmem:[%s725 + $0x60] sm:$0xff]
        %v739 = vld [vmem:[%s725 + $0x68] sm:$0xff]
        %v740 = vld [vmem:[%s725 + $0x70] sm:$0xff]
        %v741 = vld [vmem:[%s725 + $0x78] sm:$0xff]
        %v742 = vld [vmem:[%s725 + $0x80] sm:$0xff]
        %v743 = vld [vmem:[%s725 + $0x88] sm:$0xff]
        %v744 = vld [vmem:[%s725 + $0x90] sm:$0xff]
        %v745 = vld [vmem:[%s725 + $0x98] sm:$0xff]
        %v746 = vld [vmem:[%s725 + $0xa0] sm:$0xff]
        %v747 = vld [vmem:[%s725 + $0xa8] sm:$0xff]
        %v748 = vld [vmem:[%s725 + $0xb0] sm:$0xff]
        %v749 = vld [vmem:[%s725 + $0xb8] sm:$0xff]
        %v750 = vld [vmem:[%s725 + $0xc0] sm:$0xf]
        %v751 = vmul.f32 %v451, %v726
        %v752 = vmul.f32 %v452, %v727
        %v753 = vmul.f32 %v453, %v728
        %v754 = vmul.f32 %v454, %v729
        %v755 = vmul.f32 %v455, %v730
        %v756 = vmul.f32 %v456, %v731
        %v757 = vmul.f32 %v457, %v732
        %v758 = vmul.f32 %v458, %v733
        %v759 = vmul.f32 %v459, %v734
        %v760 = vmul.f32 %v460, %v735
        %v761 = vmul.f32 %v461, %v736
        %v762 = vmul.f32 %v462, %v737
        %v763 = vmul.f32 %v463, %v738
        %v764 = vmul.f32 %v464, %v739
        %v765 = vmul.f32 %v465, %v740
        %v766 = vmul.f32 %v466, %v741
        %v767 = vmul.f32 %v467, %v742
        %v768 = vmul.f32 %v468, %v743
        %v769 = vmul.f32 %v469, %v744
        %v770 = vmul.f32 %v470, %v745
        %v771 = vmul.f32 %v471, %v746
        %v772 = vmul.f32 %v472, %v747
        %v773 = vmul.f32 %v473, %v748
        %v774 = vmul.f32 %v474, %v749
        %v775 = vmul.f32 %v475, %v750
        %v776 = vadd.f32 %v751, %v752
        %v777 = vadd.f32 %v776, %v753
        %v778 = vadd.f32 %v777, %v754
        %v779 = vadd.f32 %v778, %v755
        %v780 = vadd.f32 %v779, %v756
        %v781 = vadd.f32 %v780, %v757
        %v782 = vadd.f32 %v781, %v758
        %v783 = vadd.f32 %v782, %v759
        %v784 = vadd.f32 %v783, %v760
        %v785 = vadd.f32 %v784, %v761
        %v786 = vadd.f32 %v785, %v762
        %v787 = vadd.f32 %v786, %v763
        %v788 = vadd.f32 %v787, %v764
        %v789 = vadd.f32 %v788, %v765
        %v790 = vadd.f32 %v789, %v766
        %v791 = vadd.f32 %v790, %v767
        %v792 = vadd.f32 %v791, %v768
        %v793 = vadd.f32 %v792, %v769
        %v794 = vadd.f32 %v793, %v770
        %v795 = vadd.f32 %v794, %v771
        %v796 = vadd.f32 %v795, %v772
        %v797 = vadd.f32 %v796, %v773
        %v798 = vadd.f32 %v797, %v774
        %v799 = vsel %vm549, %v775, 0.0
        %v800 = vadd.f32 %v798, %v799
        %v801 = vrot.slane %v800, 4
        %v802 = vadd.f32 %v800, %v801
        %v803 = vrot.slane %v802, 2
        %v804 = vadd.f32 %v802, %v803
        %v805 = vrot.slane %v804, 1
        %v806 = vadd.f32 %v804, %v805
        %807 = vst [vmem:[%s240 + $0x3] sm:$0x1] %v806
        %s808 = scalar_lea.vmem %s205, 800 [#allocation5]
        %v809 = vld [vmem:[%s808] sm:$0xff]
        %v810 = vld [vmem:[%s808 + $0x8] sm:$0xff]
        %v811 = vld [vmem:[%s808 + $0x10] sm:$0xff]
        %v812 = vld [vmem:[%s808 + $0x18] sm:$0xff]
        %v813 = vld [vmem:[%s808 + $0x20] sm:$0xff]
        %v814 = vld [vmem:[%s808 + $0x28] sm:$0xff]
        %v815 = vld [vmem:[%s808 + $0x30] sm:$0xff]
        %v816 = vld [vmem:[%s808 + $0x38] sm:$0xff]
        %v817 = vld [vmem:[%s808 + $0x40] sm:$0xff]
        %v818 = vld [vmem:[%s808 + $0x48] sm:$0xff]
        %v819 = vld [vmem:[%s808 + $0x50] sm:$0xff]
        %v820 = vld [vmem:[%s808 + $0x58] sm:$0xff]
        %v821 = vld [vmem:[%s808 + $0x60] sm:$0xff]
        %v822 = vld [vmem:[%s808 + $0x68] sm:$0xff]
        %v823 = vld [vmem:[%s808 + $0x70] sm:$0xff]
        %v824 = vld [vmem:[%s808 + $0x78] sm:$0xff]
        %v825 = vld [vmem:[%s808 + $0x80] sm:$0xff]
        %v826 = vld [vmem:[%s808 + $0x88] sm:$0xff]
        %v827 = vld [vmem:[%s808 + $0x90] sm:$0xff]
        %v828 = vld [vmem:[%s808 + $0x98] sm:$0xff]
        %v829 = vld [vmem:[%s808 + $0xa0] sm:$0xff]
        %v830 = vld [vmem:[%s808 + $0xa8] sm:$0xff]
        %v831 = vld [vmem:[%s808 + $0xb0] sm:$0xff]
        %v832 = vld [vmem:[%s808 + $0xb8] sm:$0xff]
        %v833 = vld [vmem:[%s808 + $0xc0] sm:$0xf]
        %v834 = vmul.f32 %v451, %v809
        %v835 = vmul.f32 %v452, %v810
        %v836 = vmul.f32 %v453, %v811
        %v837 = vmul.f32 %v454, %v812
        %v838 = vmul.f32 %v455, %v813
        %v839 = vmul.f32 %v456, %v814
        %v840 = vmul.f32 %v457, %v815
        %v841 = vmul.f32 %v458, %v816
        %v842 = vmul.f32 %v459, %v817
        %v843 = vmul.f32 %v460, %v818
        %v844 = vmul.f32 %v461, %v819
        %v845 = vmul.f32 %v462, %v820
        %v846 = vmul.f32 %v463, %v821
        %v847 = vmul.f32 %v464, %v822
        %v848 = vmul.f32 %v465, %v823
        %v849 = vmul.f32 %v466, %v824
        %v850 = vmul.f32 %v467, %v825
        %v851 = vmul.f32 %v468, %v826
        %v852 = vmul.f32 %v469, %v827
        %v853 = vmul.f32 %v470, %v828
        %v854 = vmul.f32 %v471, %v829
        %v855 = vmul.f32 %v472, %v830
        %v856 = vmul.f32 %v473, %v831
        %v857 = vmul.f32 %v474, %v832
        %v858 = vmul.f32 %v475, %v833
        %v859 = vadd.f32 %v834, %v835
        %v860 = vadd.f32 %v859, %v836
        %v861 = vadd.f32 %v860, %v837
        %v862 = vadd.f32 %v861, %v838
        %v863 = vadd.f32 %v862, %v839
        %v864 = vadd.f32 %v863, %v840
        %v865 = vadd.f32 %v864, %v841
        %v866 = vadd.f32 %v865, %v842
        %v867 = vadd.f32 %v866, %v843
        %v868 = vadd.f32 %v867, %v844
        %v869 = vadd.f32 %v868, %v845
        %v870 = vadd.f32 %v869, %v846
        %v871 = vadd.f32 %v870, %v847
        %v872 = vadd.f32 %v871, %v848
        %v873 = vadd.f32 %v872, %v849
        %v874 = vadd.f32 %v873, %v850
        %v875 = vadd.f32 %v874, %v851
        %v876 = vadd.f32 %v875, %v852
        %v877 = vadd.f32 %v876, %v853
        %v878 = vadd.f32 %v877, %v854
        %v879 = vadd.f32 %v878, %v855
        %v880 = vadd.f32 %v879, %v856
        %v881 = vadd.f32 %v880, %v857
        %v882 = vsel %vm549, %v858, 0.0
        %v883 = vadd.f32 %v881, %v882
        %v884 = vrot.slane %v883, 4
        %v885 = vadd.f32 %v883, %v884
        %v886 = vrot.slane %v885, 2
        %v887 = vadd.f32 %v885, %v886
        %v888 = vrot.slane %v887, 1
        %v889 = vadd.f32 %v887, %v888
        %890 = vst [vmem:[%s240 + $0x4] sm:$0x1] %v889
        %p891 = scmp.lt.s32.totalorder %s21, 1
        %s892 = scalar_select %p891, %s21, 1
        %s893 = smul.addr %s892, 8
        %s894 = scalar_lea.vmem %s3, %s893
        // Predicated region
        $region45: #{tpu_custom_call.1} parent=31 // pred_check
          %p895 = pneg %p112
        $region46: #{tpu_custom_call.1} parent=31 // pred_check_branch
          %897 = sbr.rel (%p895) target = $region48
        $region47: #{tpu_custom_call.1} parent=31 // pred_region
          _
        $region48: #{tpu_custom_call.1} parent=31 // pred_fallthru
          _
      $region32: #{tpu_custom_call.1} parent=5 // pred_fallthru
        _
      %p898 = scmp.le.s32.totalorder 2, %s16
      // Predicated region
      $region49: #{tpu_custom_call.1} parent=5 // pred_check
        %p899 = pneg %p898
      $region50: #{tpu_custom_call.1} parent=5 // pred_check_branch
        %901 = sbr.rel (%p899) target = $region52
      $region51: #{tpu_custom_call.1} parent=5 // pred_region
        %s902 = ssub.s32 %s16, 2
        // Predicated region
        $region53: #{tpu_custom_call.1} parent=51 // pred_check
          %p903 = pneg %p118
        $region54: #{tpu_custom_call.1} parent=51 // pred_check_branch
          %905 = sbr.rel (%p903) target = $region56
        $region55: #{tpu_custom_call.1} parent=51 // pred_region
          %p906 = scmp.lt.s32.totalorder %s22, 1
          %s907 = scalar_select %p906, %s22, 1
          %s908 = smul.addr %s907, 8
          %s909 = scalar_lea.vmem %s3, %s908
        $region56: #{tpu_custom_call.1} parent=51 // pred_fallthru
          _
      $region52: #{tpu_custom_call.1} parent=5 // pred_fallthru
        _
    $region6: #{tpu_custom_call.1} parent=1 // loop_footer
      %s20 = sadd.s32 1, %s16
    $region7: #{tpu_custom_call.1} parent=1 // loop_footer_branch
      %15 = sbr.rel target = $region3
    $region8: #{tpu_custom_call.1} parent=1 // loop_exit
      _
    %910 = vsyncpa [#allocation3], 1
    %s911 = scalar_lea.sflag [#allocation3], 1
    %912 = vsyncpa %s911, 1
    %913 = vsyncpa [#allocation6], 1
    %s914 = scalar_lea.sflag [#allocation6], 1
    %915 = vsyncpa %s914, 1
    %916 = vsyncpa [#allocation4], 1
    %s917 = scalar_lea.sflag [#allocation4], 1
    %918 = vsyncpa %s917, 1

</llo_original>
